<compile_context>
chip_gen: v6e
topology: v6e:2x2x1
jax: 0.10.0
libtpu: 0.0.40
codegen_flags: <defaults>
</compile_context>

<pallas_src>
import functools

import jax
import jax.numpy as jnp
from jax import lax
from jax.experimental import pallas as pl
from jax.experimental.pallas import tpu as pltpu

LANES = 128            # vreg lane width (last dim)
SUBLANES = 8           # f32 sublane tile
MAX_TILE_ROWS = 8192   # (8192, 128) f32 = 4 MiB per input block per step
CHUNK_ROWS = 512       # in-kernel compute chunk: (512, 128) f32 = 256 KiB
VMEM_LIMIT_BYTES = 32 << 20   # 2 inputs x 2 bufs x 4 MiB = 16 MiB + headroom


def _num_tensorcores() -> int:
    """2 on dual-TensorCore chips (v7x), 1 on v5e/v6e.  Conservative default 1."""
    try:
        kind = jax.devices()[0].device_kind.lower()
    except Exception:
        return 1
    return 2 if ("v7" in kind or "tpu7" in kind) else 1


def _round_up(a: int, b: int) -> int:
    return ((a + b - 1) // b) * b


def _kl_kernel(x_ref, y_ref, o_ref, acc_ref, *,
               tile_rows, chunk_rows, steps, total_blocks, full_blocks,
               n_full_rows, n_rem):
    """Per-(core, step) tile: acc += sum over x*log2(x/y) for this block."""
    c = pl.program_id(0)
    i = pl.program_id(1)
    b = c * steps + i                      # logical block index

    @pl.when(i == 0)
    def _init():
        acc_ref[...] = jnp.zeros_like(acc_ref)

    num_chunks = tile_rows // chunk_rows
    row_base = b * tile_rows

    def tile_sum(masked):
        def body(j, acc):
            r0 = pl.multiple_of(j * chunk_rows, chunk_rows)
            x = x_ref[pl.ds(r0, chunk_rows), :].astype(jnp.float32)
            y = y_ref[pl.ds(r0, chunk_rows), :].astype(jnp.float32)
            # x * log2(x / y) == x * (log2(x) - log2(y)); both log2s go to the
            # EUP, no f32 divide on the VPU.
            contrib = x * (jnp.log2(x) - jnp.log2(y))
            if masked:
                row_g = row_base + r0 + lax.broadcasted_iota(
                    jnp.int32, (chunk_rows, LANES), 0)
                if n_rem:
                    lane = lax.broadcasted_iota(
                        jnp.int32, (chunk_rows, LANES), 1)
                    valid = (row_g < n_full_rows) | (
                        (row_g == n_full_rows) & (lane < n_rem))
                else:
                    valid = row_g < n_full_rows
                # Select (not multiply): garbage/NaN in padded rows is discarded.
                contrib = jnp.where(valid, contrib, 0.0)
            # (chunk,128) -> (chunk/8, 8, 128) groups whole f32 vregs; the
            # axis-0 sum is pure VPU vreg adds (no per-step cross-lane reduce),
            # streamed into a single (8,128) vreg accumulator.
            return acc + contrib.reshape(
                chunk_rows // SUBLANES, SUBLANES, LANES).sum(axis=0)

        return lax.fori_loop(0, num_chunks, body,
                             jnp.zeros((SUBLANES, LANES), jnp.float32))

    need_unmasked = full_blocks > 0
    need_masked = total_blocks > full_blocks

    if need_unmasked and need_masked:
        @pl.when(b < full_blocks)
        def _interior():
            acc_ref[...] += tile_sum(masked=False)

        @pl.when(b >= full_blocks)
        def _tail():
            acc_ref[...] += tile_sum(masked=True)
    elif need_unmasked:
        acc_ref[...] += tile_sum(masked=False)
    else:
        acc_ref[...] += tile_sum(masked=True)

    @pl.when(i == steps - 1)
    def _finalize():
        o_ref[...] = acc_ref[...].reshape(1, SUBLANES, LANES)


def kl_divergence_loss(input_dist: jax.Array, output_dist: jax.Array) -> jax.Array:
    """sum(input_dist * log2(input_dist / output_dist)) via a Pallas reduction."""
    assert input_dist.shape == output_dist.shape
    orig_dtype = input_dist.dtype

    x = input_dist.reshape(-1)
    y = output_dist.reshape(-1)
    n = x.shape[0]

    # Zero-copy path whenever n % 128 == 0 (typical for image tensors): the
    # (rows, 128) view is a free reshape; all tail handling is in-kernel.
    rem = n % LANES
    if rem:
        pad = LANES - rem
        # (1.0, 1.0) pairs contribute exactly 0 to the sum.
        x = jnp.concatenate([x, jnp.ones((pad,), x.dtype)])
        y = jnp.concatenate([y, jnp.ones((pad,), y.dtype)])
        n = n + pad

    rows = n // LANES
    x2 = x.reshape(rows, LANES)
    y2 = y.reshape(rows, LANES)

    if rows <= CHUNK_ROWS:
        tile_rows = _round_up(rows, SUBLANES)   # single small block
        chunk_rows = tile_rows
    else:
        tile_rows = min(MAX_TILE_ROWS, _round_up(rows, CHUNK_ROWS))
        chunk_rows = CHUNK_ROWS

    blocks = pl.cdiv(rows, tile_rows)
    num_partials = max(1, min(_num_tensorcores(), blocks))
    steps = pl.cdiv(blocks, num_partials)
    total_blocks = num_partials * steps          # logical blocks incl. overshoot
    full_blocks = n // (tile_rows * LANES)       # blocks fully inside the data

    def in_index_map(c, i):
        # Overshoot steps (only possible on the 2-TC path when blocks is odd)
        # re-read the last valid block; their contribution is fully masked.
        return (jnp.minimum(c * steps + i, blocks - 1), 0)

    kernel = functools.partial(
        _kl_kernel,
        tile_rows=tile_rows,
        chunk_rows=chunk_rows,
        steps=steps,
        total_blocks=total_blocks,
        full_blocks=full_blocks,
        n_full_rows=n // LANES,
        n_rem=n % LANES,
    )

    out = pl.pallas_call(
        kernel,
        out_shape=jax.ShapeDtypeStruct((num_partials, SUBLANES, LANES), jnp.float32),
        grid_spec=pltpu.PrefetchScalarGridSpec(
            num_scalar_prefetch=0,
            grid=(num_partials, steps),
            in_specs=[
                pl.BlockSpec((tile_rows, LANES), in_index_map),
                pl.BlockSpec((tile_rows, LANES), in_index_map),
            ],
            out_specs=pl.BlockSpec((1, SUBLANES, LANES), lambda c, i: (c, 0, 0)),
            scratch_shapes=[pltpu.VMEM((SUBLANES, LANES), jnp.float32)],
        ),
        compiler_params=pltpu.CompilerParams(
            dimension_semantics=("parallel", "arbitrary"),
            vmem_limit_bytes=VMEM_LIMIT_BYTES,
        ),
    )(x2, y2)

    # Tiny (num_partials, 8, 128) epilogue reduce in XLA -> scalar loss.
    return jnp.sum(out).astype(orig_dtype)


def _reference(x, y):
    return jnp.sum(x * jnp.log2(x / y))


if __name__ == "__main__":
    key = jax.random.PRNGKey(0)
    k1, k2, k3, k4 = jax.random.split(key, 4)

    # Two "distributions of image pixels": NCHW, strictly positive values.
    shape = (2, 4, 16, 16)
    input_dist = jax.nn.softmax(
        jax.random.normal(k1, shape, dtype=jnp.float32).reshape(2, -1), axis=-1
    ).reshape(shape)
    output_dist = jax.nn.softmax(
        jax.random.normal(k2, shape, dtype=jnp.float32).reshape(2, -1), axis=-1
    ).reshape(shape)

    loss = kl_divergence_loss(input_dist, output_dist)
    jax.block_until_ready(loss)
    ref = _reference(input_dist, output_dist)
    assert jnp.allclose(loss, ref, rtol=1e-5, atol=1e-5), (loss, ref)

    # Second shape exercising the masked-tail path (rows not a multiple of 8).
    shape2 = (2, 3, 16, 16)
    a = jax.nn.softmax(
        jax.random.normal(k3, shape2, dtype=jnp.float32).reshape(2, -1), axis=-1
    ).reshape(shape2)
    b = jax.nn.softmax(
        jax.random.normal(k4, shape2, dtype=jnp.float32).reshape(2, -1), axis=-1
    ).reshape(shape2)
    loss2 = kl_divergence_loss(a, b)
    jax.block_until_ready(loss2)
    ref2 = _reference(a, b)
    assert jnp.allclose(loss2, ref2, rtol=1e-5, atol=1e-5), (loss2, ref2)

    print("KERNEL_OK")
</pallas_src>

<mosaic_0001>
module attributes {stable_mosaic.version = 11 : i64} {
  func.func @_kl_kernel(%arg0: i32, %arg1: i32, %arg2: memref<16x128xf32, #tpu.memory_space<vmem>>, %arg3: memref<16x128xf32, #tpu.memory_space<vmem>>, %arg4: memref<1x8x128xf32, #tpu.memory_space<vmem>>, %arg5: memref<8x128xf32, #tpu.memory_space<vmem>>) attributes {dimension_semantics = [#tpu.dimension_semantics<parallel>, #tpu.dimension_semantics<arbitrary>], iteration_bounds = array<i64: 1, 1>, scalar_prefetch = 0 : i64, scratch_operands = 1 : i64, tpu.core_type = #tpu.core_type<tc>, window_params = [{transform_indices = @transform_0, window_bounds = array<i64: 16, 128>}, {transform_indices = @transform_1, window_bounds = array<i64: 16, 128>}, {transform_indices = @transform_2, window_bounds = array<i64: 1, 8, 128>}]} {
    %c0_i32 = arith.constant 0 : i32
    %0 = arith.cmpi eq, %arg1, %c0_i32 : i32
    %1 = arith.extui %0 : i1 to i32
    %c0_i32_0 = arith.constant 0 : i32
    %2 = arith.cmpi ne, %1, %c0_i32_0 : i32
    scf.if %2 {
      %cst_12 = arith.constant 0.000000e+00 : f32
      %29 = vector.broadcast %cst_12 : f32 to vector<8x128xf32>
      %c0_13 = arith.constant 0 : index
      %c0_14 = arith.constant 0 : index
      %30 = vector.load %arg5[%c0_13, %c0_14] : memref<8x128xf32, #tpu.memory_space<vmem>>, vector<8x128xf32>
      tpu.vector_store %arg5[%c0_13, %c0_14], %29 {strides = array<i32>} : memref<8x128xf32, #tpu.memory_space<vmem>>, vector<8x128xf32>,
    } else {
    }
    %c0 = arith.constant 0 : index
    %c0_1 = arith.constant 0 : index
    %3 = vector.load %arg5[%c0, %c0_1] : memref<8x128xf32, #tpu.memory_space<vmem>>, vector<8x128xf32>
    %cst = arith.constant 0.000000e+00 : f32
    %4 = vector.broadcast %cst : f32 to vector<8x128xf32>
    %c0_i32_2 = arith.constant 0 : i32
    %c16_i32 = arith.constant 16 : i32
    %5 = arith.muli %c0_i32_2, %c16_i32 : i32
    %6 = tpu.assume_multiple %5, 16 : i32
    %7 = arith.index_cast %6 : i32 to index
    %c0_3 = arith.constant 0 : index
    %8 = vector.load %arg2[%7, %c0_3] : memref<16x128xf32, #tpu.memory_space<vmem>>, vector<16x128xf32>
    %9 = arith.index_cast %6 : i32 to index
    %c0_4 = arith.constant 0 : index
    %10 = vector.load %arg3[%9, %c0_4] : memref<16x128xf32, #tpu.memory_space<vmem>>, vector<16x128xf32>
    %11 = math.log %8 : vector<16x128xf32>
    %cst_5 = arith.constant 2.000000e+00 : f32
    %12 = math.log %cst_5 : f32
    %13 = vector.broadcast %12 : f32 to vector<16x128xf32>
    %14 = arith.divf %11, %13 : vector<16x128xf32>
    %15 = math.log %10 : vector<16x128xf32>
    %cst_6 = arith.constant 2.000000e+00 : f32
    %16 = math.log %cst_6 : f32
    %17 = vector.broadcast %16 : f32 to vector<16x128xf32>
    %18 = arith.divf %15, %17 : vector<16x128xf32>
    %19 = arith.subf %14, %18 : vector<16x128xf32>
    %20 = arith.mulf %8, %19 : vector<16x128xf32>
    %21 = vector.shape_cast %20 : vector<16x128xf32> to vector<2x8x128xf32>
    %cst_7 = arith.constant dense<0.000000e+00> : vector<8x128xf32>
    %22 = vector.multi_reduction <add>, %21, %cst_7 [0] : vector<2x8x128xf32> to vector<8x128xf32>
    %23 = arith.addf %4, %22 : vector<8x128xf32>
    %c1_i32 = arith.constant 1 : i32
    %24 = arith.addf %3, %23 : vector<8x128xf32>
    %c0_8 = arith.constant 0 : index
    %c0_9 = arith.constant 0 : index
    %25 = vector.load %arg5[%c0_8, %c0_9] : memref<8x128xf32, #tpu.memory_space<vmem>>, vector<8x128xf32>
    tpu.vector_store %arg5[%c0_8, %c0_9], %24 {strides = array<i32>} : memref<8x128xf32, #tpu.memory_space<vmem>>, vector<8x128xf32>,
    %c0_i32_10 = arith.constant 0 : i32
    %26 = arith.cmpi eq, %arg1, %c0_i32_10 : i32
    %27 = arith.extui %26 : i1 to i32
    %c0_i32_11 = arith.constant 0 : i32
    %28 = arith.cmpi ne, %27, %c0_i32_11 : i32
    scf.if %28 {
      %c0_12 = arith.constant 0 : index
      %c0_13 = arith.constant 0 : index
      %29 = vector.load %arg5[%c0_12, %c0_13] : memref<8x128xf32, #tpu.memory_space<vmem>>, vector<8x128xf32>
      %30 = vector.shape_cast %29 : vector<8x128xf32> to vector<1x8x128xf32>
      %c0_14 = arith.constant 0 : index
      %c0_15 = arith.constant 0 : index
      %c0_16 = arith.constant 0 : index
      %31 = vector.load %arg4[%c0_14, %c0_15, %c0_16] : memref<1x8x128xf32, #tpu.memory_space<vmem>>, vector<1x8x128xf32>
      tpu.vector_store %arg4[%c0_14, %c0_15, %c0_16], %30 {strides = array<i32>} : memref<1x8x128xf32, #tpu.memory_space<vmem>>, vector<1x8x128xf32>,
    } else {
    }
    return
  }
  func.func @transform_0(%arg0: i32, %arg1: i32) -> (i32, i32) {
    %c1_i32 = arith.constant 1 : i32
    %0 = arith.muli %arg0, %c1_i32 : i32
    %1 = arith.addi %0, %arg1 : i32
    %c0_i32 = arith.constant 0 : i32
    %2 = arith.minsi %1, %c0_i32 : i32
    %c0_i32_0 = arith.constant 0 : i32
    %c0_i32_1 = arith.constant 0 : i32
    return %2, %c0_i32_0 : i32, i32
  }
  func.func @transform_1(%arg0: i32, %arg1: i32) -> (i32, i32) {
    %c1_i32 = arith.constant 1 : i32
    %0 = arith.muli %arg0, %c1_i32 : i32
    %1 = arith.addi %0, %arg1 : i32
    %c0_i32 = arith.constant 0 : i32
    %2 = arith.minsi %1, %c0_i32 : i32
    %c0_i32_0 = arith.constant 0 : i32
    %c0_i32_1 = arith.constant 0 : i32
    return %2, %c0_i32_0 : i32, i32
  }
  func.func @transform_2(%arg0: i32, %arg1: i32) -> (i32, i32, i32) {
    %c0_i32 = arith.constant 0 : i32
    %c0_i32_0 = arith.constant 0 : i32
    %c0_i32_1 = arith.constant 0 : i32
    return %arg0, %c0_i32, %c0_i32_0 : i32, i32, i32
  }
}

</mosaic_0001>

<llo_original>
// kernel: tpu_custom_call.1
$region0: #{tpu_custom_call.1}
  #allocation0 [shape = 'u32[]', space=smem, size = 0x4, offset = 0x4, fixed_abs, tag = 'smem constant byte address 0x4 - core index']
  #allocation1 [shape = 'u32[144,128]{1,0:T(1,128)}', space=vmem, size = 0x12000, scoped, tag = 'internal scratch']
  #allocation2 [shape = 'f32[8,128]{1,0:T(8,128)}', space=vmem, size = 0x1000, scoped, tag = 'scratch operand']
  %s0 = inlined_call_operand.hbm [shape: f32[16,128], index: 0, kind: input, shape index: {}]
  %s1 = inlined_call_operand.hbm [shape: f32[16,128], index: 1, kind: input, shape index: {}]
  %s2 = inlined_call_operand.hbm [shape: f32[1,8,128], index: 2, kind: output, shape index: {}]
  %s3 = sld [smem:[#allocation0]]
  $region34: #{tpu_custom_call.1} parent=0
    _
  %s5 = ssub.s32 1, %s3
  %s6 = scalar_select 0, %s5, %s3
  $region1: #{tpu_custom_call.1} parent=0
    #allocation3 [shape = 'u8[8192]{0}', space=vmem, size = 0x2000, scoped, tag = 'input window, operand 0, single buffered']
    #allocation4 [shape = 's32[1]{0}', space=sflag, size = 0x4, scoped, tag = 'scoped memory for tpu_custom_call.1']
    #allocation5 [shape = 's32[1]{0}', space=sflag, size = 0x4, scoped, tag = 'scoped memory for tpu_custom_call.1']
    #allocation6 [shape = 'u8[8192]{0}', space=vmem, size = 0x2000, scoped, tag = 'input window, operand 1, single buffered']
    #allocation7 [shape = 's32[1]{0}', space=sflag, size = 0x4, scoped, tag = 'scoped memory for tpu_custom_call.1']
    #allocation8 [shape = 'u8[4096]{0}', space=vmem, size = 0x1000, scoped, tag = 'output window, operand 0, single buffered']
    %7 = vsyncpa [#allocation4], 0
    %8 = vsyncpa [#allocation7], 0
    %9 = vsyncpa [#allocation5], 0
    // Predicated region
    $region2: #{tpu_custom_call.1} parent=1 // pred_check
      _
    $region3: #{tpu_custom_call.1} parent=1 // pred_check_branch
      %11 = sbr.rel (0) target = $region5
    $region4: #{tpu_custom_call.1} parent=1 // pred_region
      %s12 = sadd.s32 0, 0
      %p13 = scmp.lt.s32.totalorder %s12, 0
      %s14 = scalar_select %p13, %s12, 0
      %s15 = smul.u32 2, %s14
      %s17 = ssub.s32 256, 256
      %18 = vsyncadd [#allocation4], %s17
      %s19 = smul.addr %s15, 128
      %s20 = scalar_lea.hbm %s0, %s19
      %s21 = sshll.u32 [#allocation3], 4
      %s22 = int_to_ptr.vmem [resolvable:$true] %s21
      %27 = dma.hbm_to_vmem [thread:$0]  %s20, 256, %s22, [#allocation4], 128, 128, 8
    $region5: #{tpu_custom_call.1} parent=1 // pred_fallthru
      _
    // Predicated region
    $region6: #{tpu_custom_call.1} parent=1 // pred_check
      _
    $region7: #{tpu_custom_call.1} parent=1 // pred_check_branch
      %29 = sbr.rel (0) target = $region9
    $region8: #{tpu_custom_call.1} parent=1 // pred_region
      %s30 = sadd.s32 0, 0
      %p31 = scmp.lt.s32.totalorder %s30, 0
      %s32 = scalar_select %p31, %s30, 0
      %s33 = smul.u32 2, %s32
      %s35 = ssub.s32 256, 256
      %36 = vsyncadd [#allocation7], %s35
      %s37 = smul.addr %s33, 128
      %s38 = scalar_lea.hbm %s1, %s37
      %s39 = sshll.u32 [#allocation6], 4
      %s40 = int_to_ptr.vmem [resolvable:$true] %s39
      %45 = dma.hbm_to_vmem [thread:$0]  %s38, 256, %s40, [#allocation7], 128, 128, 8
    $region9: #{tpu_custom_call.1} parent=1 // pred_fallthru
      _
    // Predicated region
    $region10: #{tpu_custom_call.1} parent=1 // pred_check
      _
    $region11: #{tpu_custom_call.1} parent=1 // pred_check_branch
      %47 = sbr.rel (0) target = $region13
    $region12: #{tpu_custom_call.1} parent=1 // pred_region
      %48 = dma.done [#allocation4], 256
    $region13: #{tpu_custom_call.1} parent=1 // pred_fallthru
      _
    // Predicated region
    $region14: #{tpu_custom_call.1} parent=1 // pred_check
      _
    $region15: #{tpu_custom_call.1} parent=1 // pred_check_branch
      %50 = sbr.rel (0) target = $region17
    $region16: #{tpu_custom_call.1} parent=1 // pred_region
      %51 = dma.done [#allocation7], 256
    $region17: #{tpu_custom_call.1} parent=1 // pred_fallthru
      _
    %s52 = sadd.s32 0, 0
    %p53 = scmp.lt.s32.totalorder %s52, 0
    %s54 = scalar_select %p53, %s52, 0
    %s55 = smul.u32 2, %s54
    %s56 = sadd.s32 0, 0
    %p57 = scmp.lt.s32.totalorder %s56, 0
    %s58 = scalar_select %p57, %s56, 0
    %s59 = smul.u32 2, %s58
    %p60 = scmp.eq.s32.totalorder 0, 0
    // Predicated region
    $region18: #{tpu_custom_call.1} parent=1 // pred_check
      %p61 = pneg %p60
    $region19: #{tpu_custom_call.1} parent=1 // pred_check_branch
      %63 = sbr.rel (%p61) target = $region21
    $region20: #{tpu_custom_call.1} parent=1 // pred_region
      %64 = vst [vmem:[#allocation2] sm:$0xff] 0.0
    $region21: #{tpu_custom_call.1} parent=1 // pred_fallthru
      _
    %v65 = vld [vmem:[#allocation2] sm:$0xff]
    %v66 = vld [vmem:[#allocation3] sm:$0xff]
    %v67 = vld [vmem:[#allocation3 + $0x8] sm:$0xff]
    %v68 = vld [vmem:[#allocation6] sm:$0xff]
    %v69 = vld [vmem:[#allocation6 + $0x8] sm:$0xff]
    %v70 = vlog2.pop %v66
    %v71 = vmul.f32 %v70, 0.6931472
    %v72 = vlog2.pop %v67
    %v73 = vmul.f32 %v72, 0.6931472
    %v74 = vrcp.pop 0.6931472
    %v75 = vmul.f32 %v71, %v74
    %v76 = vmul.f32 %v73, %v74
    %v77 = vlog2.pop %v68
    %v78 = vmul.f32 %v77, 0.6931472
    %v79 = vlog2.pop %v69
    %v80 = vmul.f32 %v79, 0.6931472
    %v81 = vmul.f32 %v78, %v74
    %v82 = vmul.f32 %v80, %v74
    %v83 = vsub.f32 %v75, %v81
    %v84 = vsub.f32 %v76, %v82
    %v85 = vmul.f32 %v66, %v83
    %v86 = vmul.f32 %v67, %v84
    %v87 = vadd.f32 %v85, %v86
    %v88 = vadd.f32 %v87, 0.0
    %v89 = vadd.f32 %v65, %v88
    %90 = vst [vmem:[#allocation2] sm:$0xff] %v89
    // Predicated region
    $region22: #{tpu_custom_call.1} parent=1 // pred_check
      %p91 = pneg %p60
    $region23: #{tpu_custom_call.1} parent=1 // pred_check_branch
      %93 = sbr.rel (%p91) target = $region25
    $region24: #{tpu_custom_call.1} parent=1 // pred_region
      %v94 = vld [vmem:[#allocation2] sm:$0xff]
      %95 = vst [vmem:[#allocation8] sm:$0xff] %v94
    $region25: #{tpu_custom_call.1} parent=1 // pred_fallthru
      _
    // Predicated region
    $region26: #{tpu_custom_call.1} parent=1 // pred_check
      _
    $region27: #{tpu_custom_call.1} parent=1 // pred_check_branch
      %97 = sbr.rel (0) target = $region29
    $region28: #{tpu_custom_call.1} parent=1 // pred_region
      %s99 = ssub.s32 128, 128
      %100 = vsyncadd [#allocation5], %s99
      %s102 = sshll.u32 [#allocation8], 4
      %s103 = int_to_ptr.vmem [resolvable:$true] %s102
      %105 = dma.vmem_to_hbm [thread:$0]  %s103, 128, %s2, [#allocation5]
    $region29: #{tpu_custom_call.1} parent=1 // pred_fallthru
      _
    // Predicated region
    $region30: #{tpu_custom_call.1} parent=1 // pred_check
      _
    $region31: #{tpu_custom_call.1} parent=1 // pred_check_branch
      %107 = sbr.rel (0) target = $region33
    $region32: #{tpu_custom_call.1} parent=1 // pred_region
      %108 = dma.done [#allocation5], 128
    $region33: #{tpu_custom_call.1} parent=1 // pred_fallthru
      _
    %109 = vsyncpa [#allocation4], 1
    %110 = vsyncpa [#allocation7], 1
    %111 = vsyncpa [#allocation5], 1

</llo_original>
